<compile_context>
chip_gen: v6e
topology: v6e:2x2x1
jax: 0.10.0
libtpu: 0.0.40
codegen_flags: <defaults>
</compile_context>

<pallas_src>
import functools

import jax
import jax.numpy as jnp
from jax.experimental import pallas as pl
from jax.experimental.pallas import tpu as pltpu


def _intervention_kernel(coef_ref, s_ref, ds_ref, dsn_ref, mask_ref, w_ref,
                         loss_ref, pix_ref, attr_ref, l2_ref, nc_ref,
                         ss_acc, ch_acc, *, lambda_attr, lambda_norm, s_eval):
    """Grid: axis 0 = image channel, axis 1 = HW tile (both reductions)."""
    c = pl.program_id(0)
    h = pl.program_id(1)
    c_last = pl.num_programs(0) - 1
    h_last = pl.num_programs(1) - 1

    ds = ds_ref[...].astype(jnp.float32)                  # (B, D)

    @pl.when(jnp.logical_and(c == 0, h == 0))
    def _global_init():
        ch_acc[...] = jnp.zeros_like(ch_acc)
        s = s_ref[...].astype(jnp.float32)
        nc_ref[...] = (s + s_eval * ds).astype(nc_ref.dtype)   # get_new_codes (S)

    @pl.when(h == 0)
    def _channel_init():
        ss_acc[...] = jnp.zeros_like(ss_acc)

    # Linear synthesis => new_images - images == (s_eval * delta_s) @ W_c.
    # w_ref block is (1, D, TILE_HW) bf16; f32 accumulation on the MXU.
    diff = jnp.dot(s_eval * ds, w_ref[0],
                   preferred_element_type=jnp.float32)     # (B, TILE_HW)
    masked = (1.0 - mask_ref[...].astype(jnp.float32)) * diff
    ss_acc[...] += jnp.sum(masked * masked, axis=-1, keepdims=True)   # (B, 1)

    @pl.when(h == h_last)
    def _channel_end():
        # per-channel spatial L2, summed over channels
        ch_acc[...] += jnp.sqrt(ss_acc[...])

    @pl.when(jnp.logical_and(c == c_last, h == h_last))
    def _finalize():
        # pixel_loss = mean_b( sum_c sqrt(sum_hw delta^2) )
        pixel = jnp.mean(ch_acc[...], axis=0, keepdims=True)          # (1, 1)

        # attr_loss = -mean_b( <dsn, ds>_b / (||ds||_b * ||dsn||_all) )
        dsn = dsn_ref[...].astype(jnp.float32)                        # (B, D)
        dot = jnp.sum(dsn * ds, axis=1, keepdims=True)                # (B, 1)
        norm_sn = jnp.sqrt(jnp.sum(dsn * dsn, keepdims=True))         # (1, 1)
        norm_s = jnp.sqrt(jnp.sum(ds * ds, axis=1, keepdims=True))    # (B, 1)
        attr = lambda_attr * (-1.0) * jnp.mean(
            dot / (norm_s * norm_sn), axis=0, keepdims=True)

        # l2_norm_loss = sqrt(sum(coefficient^2) + 1e-8)
        coef = coef_ref[...].astype(jnp.float32)
        l2 = lambda_norm * jnp.sqrt(jnp.sum(coef * coef, keepdims=True) + 1e-8)

        pix_ref[...] = pixel
        attr_ref[...] = attr
        l2_ref[...] = l2
        loss_ref[...] = pixel + attr + l2


def _pick_tile_hw(hw, cap=8192):
    """Largest lane-dense HW tile: multiple of 128, divides HW, <= cap."""
    if hw <= cap:
        return hw
    t = cap - (cap % 128)
    while t >= 128:
        if hw % t == 0:
            return t
        t -= 128
    return hw  # fallback: full width


def intervention_loss(coefficient, s, delta_s, delta_sn, mask, synth_w,
                      lambda_attr=0.01, lambda_norm=1e-6, s_eval=1.0):
    """coefficient: (1, D); s/delta_s/delta_sn: (B, D); mask: NCHW (B, C, H, W);
    synth_w: (C, D, H*W) synthetic generator weights (bf16 recommended)."""
    B, D = s.shape
    _, C, H, W = mask.shape
    HW = H * W
    assert synth_w.shape == (C, D, HW)

    TILE_HW = _pick_tile_hw(HW)
    nht = HW // TILE_HW

    # NCHW is contiguous, so (B, C*HW) is a free view; the per-channel HW tile
    # is addressed via the column block index (no XLA transpose).
    mask2d = mask.reshape(B, C * HW)

    kernel = functools.partial(
        _intervention_kernel,
        lambda_attr=float(lambda_attr),
        lambda_norm=float(lambda_norm),
        s_eval=float(s_eval),
    )

    scalar = jax.ShapeDtypeStruct((1, 1), jnp.float32)
    out_shape = (scalar, scalar, scalar, scalar,
                 jax.ShapeDtypeStruct((B, D), s.dtype))

    grid_spec = pltpu.PrefetchScalarGridSpec(
        num_scalar_prefetch=0,
        grid=(C, nht),
        in_specs=[
            pl.BlockSpec(coefficient.shape, lambda c, h: (0, 0)),    # coefficient
            pl.BlockSpec((B, D), lambda c, h: (0, 0)),               # s
            pl.BlockSpec((B, D), lambda c, h: (0, 0)),               # delta_s
            pl.BlockSpec((B, D), lambda c, h: (0, 0)),               # delta_sn
            pl.BlockSpec((B, TILE_HW),                               # mask (B, C*HW)
                         lambda c, h: (0, c * nht + h)),
            pl.BlockSpec((1, D, TILE_HW), lambda c, h: (c, 0, h)),   # W (C, D, HW)
        ],
        out_specs=(
            pl.BlockSpec((1, 1), lambda c, h: (0, 0)),   # loss
            pl.BlockSpec((1, 1), lambda c, h: (0, 0)),   # pixel_loss
            pl.BlockSpec((1, 1), lambda c, h: (0, 0)),   # attribute_loss
            pl.BlockSpec((1, 1), lambda c, h: (0, 0)),   # l2_norm_loss
            pl.BlockSpec((B, D), lambda c, h: (0, 0)),   # new_codes
        ),
        scratch_shapes=[
            pltpu.VMEM((B, 1), jnp.float32),   # per-channel sum of squares
            pltpu.VMEM((B, 1), jnp.float32),   # sum over channels of sqrt(ss)
        ],
    )

    loss, pix, attr, l2, new_codes = pl.pallas_call(
        kernel,
        out_shape=out_shape,
        grid_spec=grid_spec,
        compiler_params=pltpu.CompilerParams(
            dimension_semantics=("arbitrary", "arbitrary"),
            vmem_limit_bytes=48 * 1024 * 1024),
    )(coefficient, s, delta_s, delta_sn, mask2d, synth_w)

    return {
        "loss": [loss[0, 0], pix[0, 0], attr[0, 0], l2[0, 0]],
        "new_codes": new_codes,
    }


def _ref_forward(coefficient, s, delta_s, delta_sn, mask, synth_w,
                 lambda_attr=0.01, lambda_norm=1e-6, s_eval=1.0):
    """Pure-jnp reference mirroring the PyTorch forward semantics."""
    B, D = s.shape
    _, C, H, W = mask.shape
    w = synth_w.astype(jnp.float32)
    new_codes = s + s_eval * delta_s
    images = jnp.einsum("bd,cdp->bcp", s, w)
    new_images = jnp.einsum("bd,cdp->bcp", new_codes, w)
    delta = (1.0 - mask.reshape(B, C, H * W)) * (new_images - images)
    per_channel = jnp.sqrt(jnp.sum(delta ** 2, axis=-1))
    pixel = jnp.mean(jnp.sum(per_channel, axis=1))
    dot = jnp.sum(delta_sn * delta_s, axis=1)
    attr = lambda_attr * (-1.0) * jnp.mean(
        dot / (jnp.sqrt(jnp.sum(delta_s ** 2, axis=1))
               * jnp.sqrt(jnp.sum(delta_sn ** 2))))
    l2 = lambda_norm * jnp.sqrt(jnp.sum(coefficient ** 2) + 1e-8)
    return pixel + attr + l2, pixel, attr, l2, new_codes


if __name__ == "__main__":
    key = jax.random.PRNGKey(0)
    B, D, C, H, W = 2, 256, 3, 16, 16

    ks = jax.random.split(key, 6)
    coefficient = jax.random.normal(ks[0], (1, D), jnp.float32)
    s = jax.random.normal(ks[1], (B, D), jnp.float32)
    delta_s = 0.1 * jax.random.normal(ks[2], (B, D), jnp.float32)
    delta_sn = jax.random.normal(ks[3], (B, D), jnp.float32)
    # binary NCHW mask (1 = protected region, 0 = free), matching (1 - mask) * delta
    mask = (jax.random.uniform(ks[4], (B, C, H, W)) > 0.5).astype(jnp.float32)
    # deterministic synthetic generator weights, stored bf16 (HBM-byte savings)
    synth_w = (0.05 * jax.random.normal(ks[5], (C, D, H * W), jnp.float32)
               ).astype(jnp.bfloat16)

    out = intervention_loss(coefficient, s, delta_s, delta_sn, mask, synth_w)
    jax.block_until_ready(out)

    ref = _ref_forward(coefficient, s, delta_s, delta_sn, mask, synth_w)
    got = jnp.stack([out["loss"][0], out["loss"][1], out["loss"][2], out["loss"][3]])
    want = jnp.stack(list(ref[:4]))
    assert jnp.allclose(got, want, rtol=1e-4, atol=1e-5), (got, want)
    assert jnp.allclose(out["new_codes"], ref[4], rtol=1e-5, atol=1e-5)

    print("KERNEL_OK")
</pallas_src>

<mosaic_0001>
module attributes {stable_mosaic.version = 11 : i64} {
  func.func @_intervention_kernel(%arg0: i32, %arg1: i32, %arg2: memref<1x256xf32, #tpu.memory_space<vmem>>, %arg3: memref<2x256xf32, #tpu.memory_space<vmem>>, %arg4: memref<2x256xf32, #tpu.memory_space<vmem>>, %arg5: memref<2x256xf32, #tpu.memory_space<vmem>>, %arg6: memref<2x256xf32, #tpu.memory_space<vmem>>, %arg7: memref<1x256x256xbf16, #tpu.memory_space<vmem>>, %arg8: memref<1x1xf32, #tpu.memory_space<vmem>>, %arg9: memref<1x1xf32, #tpu.memory_space<vmem>>, %arg10: memref<1x1xf32, #tpu.memory_space<vmem>>, %arg11: memref<1x1xf32, #tpu.memory_space<vmem>>, %arg12: memref<2x256xf32, #tpu.memory_space<vmem>>, %arg13: memref<2x1xf32, #tpu.memory_space<vmem>>, %arg14: memref<2x1xf32, #tpu.memory_space<vmem>>) attributes {dimension_semantics = [#tpu.dimension_semantics<arbitrary>, #tpu.dimension_semantics<arbitrary>], iteration_bounds = array<i64: 3, 1>, scalar_prefetch = 0 : i64, scratch_operands = 2 : i64, tpu.core_type = #tpu.core_type<tc>, window_params = [{pipeline_mode = #tpu.pipeline_mode<synchronous>, transform_indices = @transform_0, window_bounds = array<i64: 1, 256>}, {pipeline_mode = #tpu.pipeline_mode<synchronous>, transform_indices = @transform_1, window_bounds = array<i64: 2, 256>}, {pipeline_mode = #tpu.pipeline_mode<synchronous>, transform_indices = @transform_2, window_bounds = array<i64: 2, 256>}, {pipeline_mode = #tpu.pipeline_mode<synchronous>, transform_indices = @transform_3, window_bounds = array<i64: 2, 256>}, {transform_indices = @transform_4, window_bounds = array<i64: 2, 256>}, {transform_indices = @transform_5, window_bounds = array<i64: 1, 256, 256>}, {pipeline_mode = #tpu.pipeline_mode<synchronous>, transform_indices = @transform_6, window_bounds = array<i64: 1, 1>}, {pipeline_mode = #tpu.pipeline_mode<synchronous>, transform_indices = @transform_7, window_bounds = array<i64: 1, 1>}, {pipeline_mode = #tpu.pipeline_mode<synchronous>, transform_indices = @transform_8, window_bounds = array<i64: 1, 1>}, {pipeline_mode = #tpu.pipeline_mode<synchronous>, transform_indices = @transform_9, window_bounds = array<i64: 1, 1>}, {pipeline_mode = #tpu.pipeline_mode<synchronous>, transform_indices = @transform_10, window_bounds = array<i64: 2, 256>}]} {
    %c0 = arith.constant 0 : index
    %c0_0 = arith.constant 0 : index
    %0 = vector.load %arg4[%c0, %c0_0] : memref<2x256xf32, #tpu.memory_space<vmem>>, vector<2x256xf32>
    %c0_i32 = arith.constant 0 : i32
    %1 = arith.cmpi eq, %arg0, %c0_i32 : i32
    %c0_i32_1 = arith.constant 0 : i32
    %2 = arith.cmpi eq, %arg1, %c0_i32_1 : i32
    %3 = arith.andi %1, %2 : i1
    %4 = arith.extui %3 : i1 to i32
    %c0_i32_2 = arith.constant 0 : i32
    %5 = arith.cmpi ne, %4, %c0_i32_2 : i32
    scf.if %5 {
      %cst_21 = arith.constant 0.000000e+00 : f32
      %32 = vector.broadcast %cst_21 : f32 to vector<2x1xf32>
      %c0_22 = arith.constant 0 : index
      %c0_23 = arith.constant 0 : index
      %33 = vector.load %arg14[%c0_22, %c0_23] : memref<2x1xf32, #tpu.memory_space<vmem>>, vector<2x1xf32>
      tpu.vector_store %arg14[%c0_22, %c0_23], %32 {strides = array<i32>} : memref<2x1xf32, #tpu.memory_space<vmem>>, vector<2x1xf32>,
      %c0_24 = arith.constant 0 : index
      %c0_25 = arith.constant 0 : index
      %34 = vector.load %arg3[%c0_24, %c0_25] : memref<2x256xf32, #tpu.memory_space<vmem>>, vector<2x256xf32>
      %cst_26 = arith.constant 1.000000e+00 : f32
      %35 = vector.broadcast %cst_26 : f32 to vector<2x256xf32>
      %36 = arith.mulf %35, %0 : vector<2x256xf32>
      %37 = arith.addf %34, %36 : vector<2x256xf32>
      %c0_27 = arith.constant 0 : index
      %c0_28 = arith.constant 0 : index
      %38 = vector.load %arg12[%c0_27, %c0_28] : memref<2x256xf32, #tpu.memory_space<vmem>>, vector<2x256xf32>
      tpu.vector_store %arg12[%c0_27, %c0_28], %37 {strides = array<i32>} : memref<2x256xf32, #tpu.memory_space<vmem>>, vector<2x256xf32>,
    } else {
    }
    %c0_i32_3 = arith.constant 0 : i32
    %6 = arith.cmpi eq, %arg1, %c0_i32_3 : i32
    %7 = arith.extui %6 : i1 to i32
    %c0_i32_4 = arith.constant 0 : i32
    %8 = arith.cmpi ne, %7, %c0_i32_4 : i32
    scf.if %8 {
      %cst_21 = arith.constant 0.000000e+00 : f32
      %32 = vector.broadcast %cst_21 : f32 to vector<2x1xf32>
      %c0_22 = arith.constant 0 : index
      %c0_23 = arith.constant 0 : index
      %33 = vector.load %arg13[%c0_22, %c0_23] : memref<2x1xf32, #tpu.memory_space<vmem>>, vector<2x1xf32>
      tpu.vector_store %arg13[%c0_22, %c0_23], %32 {strides = array<i32>} : memref<2x1xf32, #tpu.memory_space<vmem>>, vector<2x1xf32>,
    } else {
    }
    %cst = arith.constant 1.000000e+00 : f32
    %9 = vector.broadcast %cst : f32 to vector<2x256xf32>
    %10 = arith.mulf %9, %0 : vector<2x256xf32>
    %c0_5 = arith.constant 0 : index
    %c0_6 = arith.constant 0 : index
    %c0_7 = arith.constant 0 : index
    %11 = vector.load %arg7[%c0_5, %c0_6, %c0_7] : memref<1x256x256xbf16, #tpu.memory_space<vmem>>, vector<1x256x256xbf16>
    %12 = vector.shape_cast %11 : vector<1x256x256xbf16> to vector<256x256xbf16>
    %cst_8 = arith.constant dense<0.000000e+00> : vector<2x256xf32>
    %13 = tpu.matmul %10, %12, %cst_8 {dimension_numbers = #tpu.dot_dimension_numbers<[1], [0], [0], [1], [0, 0, 1, 1], [], []>} : vector<2x256xf32>, vector<256x256xbf16>, vector<2x256xf32> -> vector<2x256xf32>
    %c0_9 = arith.constant 0 : index
    %c0_10 = arith.constant 0 : index
    %14 = vector.load %arg6[%c0_9, %c0_10] : memref<2x256xf32, #tpu.memory_space<vmem>>, vector<2x256xf32>
    %cst_11 = arith.constant 1.000000e+00 : f32
    %15 = vector.broadcast %cst_11 : f32 to vector<2x256xf32>
    %16 = arith.subf %15, %14 : vector<2x256xf32>
    %17 = arith.mulf %16, %13 : vector<2x256xf32>
    %c0_12 = arith.constant 0 : index
    %c0_13 = arith.constant 0 : index
    %18 = vector.load %arg13[%c0_12, %c0_13] : memref<2x1xf32, #tpu.memory_space<vmem>>, vector<2x1xf32>
    %19 = arith.mulf %17, %17 : vector<2x256xf32>
    %cst_14 = arith.constant dense<0.000000e+00> : vector<2xf32>
    %20 = vector.multi_reduction <add>, %19, %cst_14 [1] : vector<2x256xf32> to vector<2xf32>
    %21 = vector.shape_cast %20 : vector<2xf32> to vector<2x1xf32>
    %22 = arith.addf %18, %21 : vector<2x1xf32>
    %c0_15 = arith.constant 0 : index
    %c0_16 = arith.constant 0 : index
    %23 = vector.load %arg13[%c0_15, %c0_16] : memref<2x1xf32, #tpu.memory_space<vmem>>, vector<2x1xf32>
    tpu.vector_store %arg13[%c0_15, %c0_16], %22 {strides = array<i32>} : memref<2x1xf32, #tpu.memory_space<vmem>>, vector<2x1xf32>,
    %c0_i32_17 = arith.constant 0 : i32
    %24 = arith.cmpi eq, %arg1, %c0_i32_17 : i32
    %25 = arith.extui %24 : i1 to i32
    %c0_i32_18 = arith.constant 0 : i32
    %26 = arith.cmpi ne, %25, %c0_i32_18 : i32
    scf.if %26 {
      %c0_21 = arith.constant 0 : index
      %c0_22 = arith.constant 0 : index
      %32 = vector.load %arg14[%c0_21, %c0_22] : memref<2x1xf32, #tpu.memory_space<vmem>>, vector<2x1xf32>
      %c0_23 = arith.constant 0 : index
      %c0_24 = arith.constant 0 : index
      %33 = vector.load %arg13[%c0_23, %c0_24] : memref<2x1xf32, #tpu.memory_space<vmem>>, vector<2x1xf32>
      %34 = math.sqrt %33 : vector<2x1xf32>
      %35 = arith.addf %32, %34 : vector<2x1xf32>
      %c0_25 = arith.constant 0 : index
      %c0_26 = arith.constant 0 : index
      %36 = vector.load %arg14[%c0_25, %c0_26] : memref<2x1xf32, #tpu.memory_space<vmem>>, vector<2x1xf32>
      tpu.vector_store %arg14[%c0_25, %c0_26], %35 {strides = array<i32>} : memref<2x1xf32, #tpu.memory_space<vmem>>, vector<2x1xf32>,
    } else {
    }
    %c2_i32 = arith.constant 2 : i32
    %27 = arith.cmpi eq, %arg0, %c2_i32 : i32
    %c0_i32_19 = arith.constant 0 : i32
    %28 = arith.cmpi eq, %arg1, %c0_i32_19 : i32
    %29 = arith.andi %27, %28 : i1
    %30 = arith.extui %29 : i1 to i32
    %c0_i32_20 = arith.constant 0 : i32
    %31 = arith.cmpi ne, %30, %c0_i32_20 : i32
    scf.if %31 {
      %c0_21 = arith.constant 0 : index
      %c0_22 = arith.constant 0 : index
      %32 = vector.load %arg14[%c0_21, %c0_22] : memref<2x1xf32, #tpu.memory_space<vmem>>, vector<2x1xf32>
      %cst_23 = arith.constant dense<0.000000e+00> : vector<1xf32>
      %33 = vector.multi_reduction <add>, %32, %cst_23 [0] : vector<2x1xf32> to vector<1xf32>
      %34 = vector.shape_cast %33 : vector<1xf32> to vector<1x1xf32>
      %cst_24 = arith.constant 2.000000e+00 : f32
      %35 = vector.broadcast %cst_24 : f32 to vector<1x1xf32>
      %36 = arith.divf %34, %35 : vector<1x1xf32>
      %c0_25 = arith.constant 0 : index
      %c0_26 = arith.constant 0 : index
      %37 = vector.load %arg5[%c0_25, %c0_26] : memref<2x256xf32, #tpu.memory_space<vmem>>, vector<2x256xf32>
      %38 = arith.mulf %37, %0 : vector<2x256xf32>
      %cst_27 = arith.constant dense<0.000000e+00> : vector<2xf32>
      %39 = vector.multi_reduction <add>, %38, %cst_27 [1] : vector<2x256xf32> to vector<2xf32>
      %40 = vector.shape_cast %39 : vector<2xf32> to vector<2x1xf32>
      %41 = arith.mulf %37, %37 : vector<2x256xf32>
      %42 = vector.shape_cast %41 : vector<2x256xf32> to vector<1x2x256xf32>
      %cst_28 = arith.constant dense<0.000000e+00> : vector<1xf32>
      %43 = vector.multi_reduction <add>, %42, %cst_28 [1, 2] : vector<1x2x256xf32> to vector<1xf32>
      %44 = vector.shape_cast %43 : vector<1xf32> to vector<1x1x1xf32>
      %45 = vector.extract %44[0, 0, 0] : f32 from vector<1x1x1xf32>
      %46 = vector.broadcast %45 : f32 to vector<1x1xf32>
      %47 = math.sqrt %46 : vector<1x1xf32>
      %48 = arith.mulf %0, %0 : vector<2x256xf32>
      %cst_29 = arith.constant dense<0.000000e+00> : vector<2xf32>
      %49 = vector.multi_reduction <add>, %48, %cst_29 [1] : vector<2x256xf32> to vector<2xf32>
      %50 = vector.shape_cast %49 : vector<2xf32> to vector<2x1xf32>
      %51 = math.sqrt %50 : vector<2x1xf32>
      %52 = vector.broadcast %47 : vector<1x1xf32> to vector<2x1xf32>
      %53 = arith.mulf %51, %52 : vector<2x1xf32>
      %54 = arith.divf %40, %53 : vector<2x1xf32>
      %cst_30 = arith.constant dense<0.000000e+00> : vector<1xf32>
      %55 = vector.multi_reduction <add>, %54, %cst_30 [0] : vector<2x1xf32> to vector<1xf32>
      %56 = vector.shape_cast %55 : vector<1xf32> to vector<1x1xf32>
      %cst_31 = arith.constant 2.000000e+00 : f32
      %57 = vector.broadcast %cst_31 : f32 to vector<1x1xf32>
      %58 = arith.divf %56, %57 : vector<1x1xf32>
      %cst_32 = arith.constant -0.00999999977 : f32
      %59 = vector.broadcast %cst_32 : f32 to vector<1x1xf32>
      %60 = arith.mulf %59, %58 : vector<1x1xf32>
      %c0_33 = arith.constant 0 : index
      %c0_34 = arith.constant 0 : index
      %61 = vector.load %arg2[%c0_33, %c0_34] : memref<1x256xf32, #tpu.memory_space<vmem>>, vector<1x256xf32>
      %62 = arith.mulf %61, %61 : vector<1x256xf32>
      %63 = vector.shape_cast %62 : vector<1x256xf32> to vector<1x1x256xf32>
      %cst_35 = arith.constant dense<0.000000e+00> : vector<1xf32>
      %64 = vector.multi_reduction <add>, %63, %cst_35 [1, 2] : vector<1x1x256xf32> to vector<1xf32>
      %65 = vector.shape_cast %64 : vector<1xf32> to vector<1x1x1xf32>
      %66 = vector.extract %65[0, 0, 0] : f32 from vector<1x1x1xf32>
      %67 = vector.broadcast %66 : f32 to vector<1x1xf32>
      %cst_36 = arith.constant 9.99999993E-9 : f32
      %68 = vector.broadcast %cst_36 : f32 to vector<1x1xf32>
      %69 = arith.addf %67, %68 : vector<1x1xf32>
      %70 = math.sqrt %69 : vector<1x1xf32>
      %cst_37 = arith.constant 9.99999997E-7 : f32
      %71 = vector.broadcast %cst_37 : f32 to vector<1x1xf32>
      %72 = arith.mulf %71, %70 : vector<1x1xf32>
      %c0_38 = arith.constant 0 : index
      %c0_39 = arith.constant 0 : index
      %73 = vector.load %arg9[%c0_38, %c0_39] : memref<1x1xf32, #tpu.memory_space<vmem>>, vector<1x1xf32>
      tpu.vector_store %arg9[%c0_38, %c0_39], %36 {strides = array<i32>} : memref<1x1xf32, #tpu.memory_space<vmem>>, vector<1x1xf32>,
      %c0_40 = arith.constant 0 : index
      %c0_41 = arith.constant 0 : index
      %74 = vector.load %arg10[%c0_40, %c0_41] : memref<1x1xf32, #tpu.memory_space<vmem>>, vector<1x1xf32>
      tpu.vector_store %arg10[%c0_40, %c0_41], %60 {strides = array<i32>} : memref<1x1xf32, #tpu.memory_space<vmem>>, vector<1x1xf32>,
      %c0_42 = arith.constant 0 : index
      %c0_43 = arith.constant 0 : index
      %75 = vector.load %arg11[%c0_42, %c0_43] : memref<1x1xf32, #tpu.memory_space<vmem>>, vector<1x1xf32>
      tpu.vector_store %arg11[%c0_42, %c0_43], %72 {strides = array<i32>} : memref<1x1xf32, #tpu.memory_space<vmem>>, vector<1x1xf32>,
      %76 = arith.addf %36, %60 : vector<1x1xf32>
      %77 = arith.addf %76, %72 : vector<1x1xf32>
      %c0_44 = arith.constant 0 : index
      %c0_45 = arith.constant 0 : index
      %78 = vector.load %arg8[%c0_44, %c0_45] : memref<1x1xf32, #tpu.memory_space<vmem>>, vector<1x1xf32>
      tpu.vector_store %arg8[%c0_44, %c0_45], %77 {strides = array<i32>} : memref<1x1xf32, #tpu.memory_space<vmem>>, vector<1x1xf32>,
    } else {
    }
    return
  }
  func.func @transform_0(%arg0: i32, %arg1: i32) -> (i32, i32) {
    %c0_i32 = arith.constant 0 : i32
    %c0_i32_0 = arith.constant 0 : i32
    %c0_i32_1 = arith.constant 0 : i32
    return %c0_i32, %c0_i32_0 : i32, i32
  }
  func.func @transform_1(%arg0: i32, %arg1: i32) -> (i32, i32) {
    %c0_i32 = arith.constant 0 : i32
    %c0_i32_0 = arith.constant 0 : i32
    %c0_i32_1 = arith.constant 0 : i32
    return %c0_i32, %c0_i32_0 : i32, i32
  }
  func.func @transform_2(%arg0: i32, %arg1: i32) -> (i32, i32) {
    %c0_i32 = arith.constant 0 : i32
    %c0_i32_0 = arith.constant 0 : i32
    %c0_i32_1 = arith.constant 0 : i32
    return %c0_i32, %c0_i32_0 : i32, i32
  }
  func.func @transform_3(%arg0: i32, %arg1: i32) -> (i32, i32) {
    %c0_i32 = arith.constant 0 : i32
    %c0_i32_0 = arith.constant 0 : i32
    %c0_i32_1 = arith.constant 0 : i32
    return %c0_i32, %c0_i32_0 : i32, i32
  }
  func.func @transform_4(%arg0: i32, %arg1: i32) -> (i32, i32) {
    %c1_i32 = arith.constant 1 : i32
    %0 = arith.muli %arg0, %c1_i32 : i32
    %1 = arith.addi %0, %arg1 : i32
    %c0_i32 = arith.constant 0 : i32
    %c0_i32_0 = arith.constant 0 : i32
    return %c0_i32, %1 : i32, i32
  }
  func.func @transform_5(%arg0: i32, %arg1: i32) -> (i32, i32, i32) {
    %c0_i32 = arith.constant 0 : i32
    %c0_i32_0 = arith.constant 0 : i32
    return %arg0, %c0_i32, %arg1 : i32, i32, i32
  }
  func.func @transform_6(%arg0: i32, %arg1: i32) -> (i32, i32) {
    %c0_i32 = arith.constant 0 : i32
    %c0_i32_0 = arith.constant 0 : i32
    %c0_i32_1 = arith.constant 0 : i32
    return %c0_i32, %c0_i32_0 : i32, i32
  }
  func.func @transform_7(%arg0: i32, %arg1: i32) -> (i32, i32) {
    %c0_i32 = arith.constant 0 : i32
    %c0_i32_0 = arith.constant 0 : i32
    %c0_i32_1 = arith.constant 0 : i32
    return %c0_i32, %c0_i32_0 : i32, i32
  }
  func.func @transform_8(%arg0: i32, %arg1: i32) -> (i32, i32) {
    %c0_i32 = arith.constant 0 : i32
    %c0_i32_0 = arith.constant 0 : i32
    %c0_i32_1 = arith.constant 0 : i32
    return %c0_i32, %c0_i32_0 : i32, i32
  }
  func.func @transform_9(%arg0: i32, %arg1: i32) -> (i32, i32) {
    %c0_i32 = arith.constant 0 : i32
    %c0_i32_0 = arith.constant 0 : i32
    %c0_i32_1 = arith.constant 0 : i32
    return %c0_i32, %c0_i32_0 : i32, i32
  }
  func.func @transform_10(%arg0: i32, %arg1: i32) -> (i32, i32) {
    %c0_i32 = arith.constant 0 : i32
    %c0_i32_0 = arith.constant 0 : i32
    %c0_i32_1 = arith.constant 0 : i32
    return %c0_i32, %c0_i32_0 : i32, i32
  }
}

</mosaic_0001>

<llo_original>
// kernel: tpu_custom_call.1
$region0: #{tpu_custom_call.1}
  #allocation0 [shape = 'u32[]', space=smem, size = 0x4, offset = 0x4, fixed_abs, tag = 'smem constant byte address 0x4 - core index']
  #allocation1 [shape = 'u32[144,128]{1,0:T(1,128)}', space=vmem, size = 0x12000, scoped, tag = 'internal scratch']
  #allocation2 [shape = 'f32[2,1]{1,0:T(2,128)}', space=vmem, size = 0x400, scoped, tag = 'scratch operand']
  #allocation3 [shape = 'f32[2,1]{1,0:T(2,128)}', space=vmem, size = 0x400, scoped, tag = 'scratch operand']
  %s0 = inlined_call_operand.hbm [shape: f32[1,256], index: 0, kind: input, shape index: {}]
  %s1 = inlined_call_operand.hbm [shape: f32[2,256], index: 1, kind: input, shape index: {}]
  %s2 = inlined_call_operand.hbm [shape: f32[2,256], index: 2, kind: input, shape index: {}]
  %s3 = inlined_call_operand.vmem [shape: f32[2,256], index: 3, kind: input, shape index: {}]
  %s4 = inlined_call_operand.hbm [shape: f32[2,768], index: 4, kind: input, shape index: {}]
  %s5 = inlined_call_operand.hbm [shape: bf16[3,256,256], index: 5, kind: input, shape index: {}]
  %s6 = inlined_call_operand.hbm [shape: f32[1,1], index: 6, kind: output, shape index: {0}]
  %s7 = inlined_call_operand.hbm [shape: f32[1,1], index: 7, kind: output, shape index: {1}]
  %s8 = inlined_call_operand.hbm [shape: f32[1,1], index: 8, kind: output, shape index: {2}]
  %s9 = inlined_call_operand.hbm [shape: f32[1,1], index: 9, kind: output, shape index: {3}]
  %s10 = inlined_call_operand.hbm [shape: f32[2,256], index: 10, kind: output, shape index: {4}]
  %11 = xla_tuple %s6, %s7, %s8, %s9, %s10
  %s12 = sld [smem:[#allocation0]]
  $region125: #{tpu_custom_call.1} parent=0
    _
  %s14 = ssub.s32 1, %s12
  %s15 = scalar_select 0, %s14, %s12
  $region1: #{tpu_custom_call.1} parent=0
    #allocation4 [shape = 'u8[1024]{0}', space=vmem, size = 0x400, scoped, tag = 'input window, operand 0, single buffered']
    #allocation5 [shape = 's32[2]{0}', space=sflag, size = 0x8, scoped, tag = 'scoped memory for tpu_custom_call.1']
    #allocation6 [shape = 's32[2]{0}', space=sflag, size = 0x8, scoped, tag = 'scoped memory for tpu_custom_call.1']
    #allocation7 [shape = 'u8[2048]{0}', space=vmem, size = 0x800, scoped, tag = 'input window, operand 1, single buffered']
    #allocation8 [shape = 's32[1]{0}', space=sflag, size = 0x4, scoped, tag = 'scoped memory for tpu_custom_call.1']
    #allocation9 [shape = 'u8[2048]{0}', space=vmem, size = 0x800, scoped, tag = 'input window, operand 2, single buffered']
    #allocation10 [shape = 'u8[4096]{0}', space=vmem, size = 0x1000, scoped, tag = 'input window, operand 4']
    #allocation11 [shape = 's32[2]{0}', space=sflag, size = 0x8, scoped, tag = 'scoped memory for tpu_custom_call.1']
    #allocation12 [shape = 'u8[262144]{0}', space=vmem, size = 0x40000, scoped, tag = 'input window, operand 5']
    #allocation13 [shape = 'u8[512]{0}', space=vmem, size = 0x400, scoped, tag = 'output window, operand 0, single buffered']
    #allocation14 [shape = 'u8[512]{0}', space=vmem, size = 0x400, scoped, tag = 'output window, operand 1, single buffered']
    #allocation15 [shape = 's32[1]{0}', space=sflag, size = 0x4, scoped, tag = 'scoped memory for tpu_custom_call.1']
    #allocation16 [shape = 'u8[512]{0}', space=vmem, size = 0x400, scoped, tag = 'output window, operand 2, single buffered']
    #allocation17 [shape = 'u8[512]{0}', space=vmem, size = 0x400, scoped, tag = 'output window, operand 3, single buffered']
    #allocation18 [shape = 's32[1]{0}', space=sflag, size = 0x4, scoped, tag = 'scoped memory for tpu_custom_call.1']
    #allocation19 [shape = 'u8[2048]{0}', space=vmem, size = 0x800, scoped, tag = 'output window, operand 4, single buffered']
    %16 = vsyncpa [#allocation5], 0
    %17 = vsyncpa [#allocation8], 0
    %18 = vsyncpa [#allocation11], 0
    %s19 = scalar_lea.sflag [#allocation11], 1
    %20 = vsyncpa %s19, 0
    %21 = vsyncpa [#allocation6], 0
    %22 = vsyncpa [#allocation15], 0
    %23 = vsyncpa [#allocation18], 0
    loop: start=0, step=1, limit=5
    $region2: #{tpu_custom_call.1} parent=1 // loop_pre_header
      _
    $region3: #{tpu_custom_call.1} parent=1 // loop_header
      %s25 = sphi 0, %s29
      %p26 = scmp.ge.s32.totalorder %s25, 5
      %s32 = sphi 0, %s44
      %s33 = sphi 0, %s40
      %s34 = sphi 0, %s32
      %s35 = sphi 0, %s33
      %s36 = sphi 0, %s34
      %s37 = sphi 0, %s35
      %s45 = sphi 0, %s45
      %s47 = sphi 0, %s45
      %s48 = sphi 0, %s47
      %s62 = sphi 0, %s48
      %s66 = sphi 0, %s66
      %s68 = sphi 0, %s66
      %s69 = sphi 0, %s68
      %s83 = sphi 0, %s69
      %s87 = sphi 0, %s87
      %s89 = sphi 0, %s87
      %s90 = sphi 0, %s89
      %s104 = sphi 0, %s90
      %s108 = sphi 0, %s108
      %s110 = sphi 0, %s108
      %s111 = sphi 0, %s110
      %s125 = sphi 0, %s111
      %s133 = sphi 0, %s135
      %s136 = sphi 0, %s133
      %s137 = sphi 0, %s136
      %s153 = sphi 0, %s137
      %s161 = sphi 0, %s163
      %s164 = sphi 0, %s161
      %s165 = sphi 0, %s164
      %s181 = sphi 0, %s165
      %s185 = sphi 0, %s185
      %s187 = sphi 0, %s185
      %s188 = sphi 0, %s187
      %s202 = sphi 0, %s188
      %s206 = sphi 0, %s206
      %s208 = sphi 0, %s206
      %s209 = sphi 0, %s208
      %s223 = sphi 0, %s209
      %s227 = sphi 0, %s227
      %s229 = sphi 0, %s227
      %s230 = sphi 0, %s229
      %s244 = sphi 0, %s230
      %s248 = sphi 0, %s248
      %s250 = sphi 0, %s248
      %s251 = sphi 0, %s250
      %s265 = sphi 0, %s251
      %s269 = sphi 0, %s269
      %s271 = sphi 0, %s269
      %s272 = sphi 0, %s271
      %s286 = sphi 0, %s272
    $region4: #{tpu_custom_call.1} parent=1 // loop_header_branch
      %28 = sbr.rel (%p26) target = $region8
    $region5: #{tpu_custom_call.1} parent=1 // loop_body
      %s30 = ssub.s32 %s25, 1
      %s31 = ssub.s32 %s25, 2
      %s38 = sadd.s32 1, %s33
      %p39 = scmp.ge.s32.totalorder %s38, 1
      %s40 = scalar_select %p39, 0, %s38
      %s41 = sadd.s32 1, %s32
      %s42 = scalar_select %p39, %s41, %s32
      %p43 = scmp.ge.s32.totalorder %s42, 3
      %s44 = scalar_select %p43, 0, %s42
      %s46 = sadd.s32 %s45, 1
      %p49 = scmp.eq.s32.totalorder %s25, 2
      %p50 = scmp.ne.s32.totalorder %s45, %s47
      %p51 = scmp.eq.s32.totalorder %s25, 0
      %p52 = por %p50, %p51
      %p53 = scmp.ne.s32.totalorder %s45, %s47
      %p54 = scmp.eq.s32.totalorder %s30, 2
      %p55 = por %p53, %p54
      %p56 = scmp.ne.s32.totalorder %s47, %s48
      %p57 = scmp.eq.s32.totalorder %s30, 0
      %p58 = por %p56, %p57
      %p59 = scmp.ne.s32.totalorder %s47, %s48
      %p60 = scmp.eq.s32.totalorder %s31, 2
      %p61 = por %p59, %p60
      %p63 = scmp.ne.s32.totalorder %s48, %s62
      %p64 = scmp.eq.s32.totalorder %s31, 0
      %p65 = por %p63, %p64
      %s67 = sadd.s32 %s66, 1
      %p70 = scmp.eq.s32.totalorder %s25, 2
      %p71 = scmp.ne.s32.totalorder %s66, %s68
      %p72 = scmp.eq.s32.totalorder %s25, 0
      %p73 = por %p71, %p72
      %p74 = scmp.ne.s32.totalorder %s66, %s68
      %p75 = scmp.eq.s32.totalorder %s30, 2
      %p76 = por %p74, %p75
      %p77 = scmp.ne.s32.totalorder %s68, %s69
      %p78 = scmp.eq.s32.totalorder %s30, 0
      %p79 = por %p77, %p78
      %p80 = scmp.ne.s32.totalorder %s68, %s69
      %p81 = scmp.eq.s32.totalorder %s31, 2
      %p82 = por %p80, %p81
      %p84 = scmp.ne.s32.totalorder %s69, %s83
      %p85 = scmp.eq.s32.totalorder %s31, 0
      %p86 = por %p84, %p85
      %s88 = sadd.s32 %s87, 1
      %p91 = scmp.eq.s32.totalorder %s25, 2
      %p92 = scmp.ne.s32.totalorder %s87, %s89
      %p93 = scmp.eq.s32.totalorder %s25, 0
      %p94 = por %p92, %p93
      %p95 = scmp.ne.s32.totalorder %s87, %s89
      %p96 = scmp.eq.s32.totalorder %s30, 2
      %p97 = por %p95, %p96
      %p98 = scmp.ne.s32.totalorder %s89, %s90
      %p99 = scmp.eq.s32.totalorder %s30, 0
      %p100 = por %p98, %p99
      %p101 = scmp.ne.s32.totalorder %s89, %s90
      %p102 = scmp.eq.s32.totalorder %s31, 2
      %p103 = por %p101, %p102
      %p105 = scmp.ne.s32.totalorder %s90, %s104
      %p106 = scmp.eq.s32.totalorder %s31, 0
      %p107 = por %p105, %p106
      %s109 = sadd.s32 %s108, 1
      %p112 = scmp.eq.s32.totalorder %s25, 2
      %p113 = scmp.ne.s32.totalorder %s108, %s110
      %p114 = scmp.eq.s32.totalorder %s25, 0
      %p115 = por %p113, %p114
      %p116 = scmp.ne.s32.totalorder %s108, %s110
      %p117 = scmp.eq.s32.totalorder %s30, 2
      %p118 = por %p116, %p117
      %p119 = scmp.ne.s32.totalorder %s110, %s111
      %p120 = scmp.eq.s32.totalorder %s30, 0
      %p121 = por %p119, %p120
      %p122 = scmp.ne.s32.totalorder %s110, %s111
      %p123 = scmp.eq.s32.totalorder %s31, 2
      %p124 = por %p122, %p123
      %p126 = scmp.ne.s32.totalorder %s111, %s125
      %p127 = scmp.eq.s32.totalorder %s31, 0
      %p128 = por %p126, %p127
      %s129 = sadd.s32 %s32, %s33
      %s130 = sadd.s32 %s44, %s40
      %s131 = ssub.s32 %s129, %s130
      %p132 = scmp.eq.s32.totalorder %s131, 0
      %s134 = sadd.s32 %s133, 1
      %s135 = scalar_select %p132, %s133, %s134
      %p138 = pneg %p132
      %p139 = scmp.eq.s32.totalorder %s25, 2
      %p140 = por %p138, %p139
      %p141 = scmp.ne.s32.totalorder %s133, %s136
      %p142 = scmp.eq.s32.totalorder %s25, 0
      %p143 = por %p141, %p142
      %p144 = scmp.ne.s32.totalorder %s133, %s136
      %p145 = scmp.eq.s32.totalorder %s30, 2
      %p146 = por %p144, %p145
      %p147 = scmp.ne.s32.totalorder %s136, %s137
      %p148 = scmp.eq.s32.totalorder %s30, 0
      %p149 = por %p147, %p148
      %p150 = scmp.ne.s32.totalorder %s136, %s137
      %p151 = scmp.eq.s32.totalorder %s31, 2
      %p152 = por %p150, %p151
      %p154 = scmp.ne.s32.totalorder %s137, %s153
      %p155 = scmp.eq.s32.totalorder %s31, 0
      %p156 = por %p154, %p155
      %s157 = ssub.s32 %s32, %s44
      %s158 = ssub.s32 %s33, %s40
      %s159 = sor.u32 %s157, %s158
      %p160 = scmp.eq.s32.totalorder %s159, 0
      %s162 = sadd.s32 %s161, 1
      %s163 = scalar_select %p160, %s161, %s162
      %p166 = pneg %p160
      %p167 = scmp.eq.s32.totalorder %s25, 2
      %p168 = por %p166, %p167
      %p169 = scmp.ne.s32.totalorder %s161, %s164
      %p170 = scmp.eq.s32.totalorder %s25, 0
      %p171 = por %p169, %p170
      %p172 = scmp.ne.s32.totalorder %s161, %s164
      %p173 = scmp.eq.s32.totalorder %s30, 2
      %p174 = por %p172, %p173
      %p175 = scmp.ne.s32.totalorder %s164, %s165
      %p176 = scmp.eq.s32.totalorder %s30, 0
      %p177 = por %p175, %p176
      %p178 = scmp.ne.s32.totalorder %s164, %s165
      %p179 = scmp.eq.s32.totalorder %s31, 2
      %p180 = por %p178, %p179
      %p182 = scmp.ne.s32.totalorder %s165, %s181
      %p183 = scmp.eq.s32.totalorder %s31, 0
      %p184 = por %p182, %p183
      %s186 = sadd.s32 %s185, 1
      %p189 = scmp.eq.s32.totalorder %s25, 2
      %p190 = scmp.ne.s32.totalorder %s185, %s187
      %p191 = scmp.eq.s32.totalorder %s25, 0
      %p192 = por %p190, %p191
      %p193 = scmp.ne.s32.totalorder %s185, %s187
      %p194 = scmp.eq.s32.totalorder %s30, 2
      %p195 = por %p193, %p194
      %p196 = scmp.ne.s32.totalorder %s187, %s188
      %p197 = scmp.eq.s32.totalorder %s30, 0
      %p198 = por %p196, %p197
      %p199 = scmp.ne.s32.totalorder %s187, %s188
      %p200 = scmp.eq.s32.totalorder %s31, 2
      %p201 = por %p199, %p200
      %p203 = scmp.ne.s32.totalorder %s188, %s202
      %p204 = scmp.eq.s32.totalorder %s31, 0
      %p205 = por %p203, %p204
      %s207 = sadd.s32 %s206, 1
      %p210 = scmp.eq.s32.totalorder %s25, 2
      %p211 = scmp.ne.s32.totalorder %s206, %s208
      %p212 = scmp.eq.s32.totalorder %s25, 0
      %p213 = por %p211, %p212
      %p214 = scmp.ne.s32.totalorder %s206, %s208
      %p215 = scmp.eq.s32.totalorder %s30, 2
      %p216 = por %p214, %p215
      %p217 = scmp.ne.s32.totalorder %s208, %s209
      %p218 = scmp.eq.s32.totalorder %s30, 0
      %p219 = por %p217, %p218
      %p220 = scmp.ne.s32.totalorder %s208, %s209
      %p221 = scmp.eq.s32.totalorder %s31, 2
      %p222 = por %p220, %p221
      %p224 = scmp.ne.s32.totalorder %s209, %s223
      %p225 = scmp.eq.s32.totalorder %s31, 0
      %p226 = por %p224, %p225
      %s228 = sadd.s32 %s227, 1
      %p231 = scmp.eq.s32.totalorder %s25, 2
      %p232 = scmp.ne.s32.totalorder %s227, %s229
      %p233 = scmp.eq.s32.totalorder %s25, 0
      %p234 = por %p232, %p233
      %p235 = scmp.ne.s32.totalorder %s227, %s229
      %p236 = scmp.eq.s32.totalorder %s30, 2
      %p237 = por %p235, %p236
      %p238 = scmp.ne.s32.totalorder %s229, %s230
      %p239 = scmp.eq.s32.totalorder %s30, 0
      %p240 = por %p238, %p239
      %p241 = scmp.ne.s32.totalorder %s229, %s230
      %p242 = scmp.eq.s32.totalorder %s31, 2
      %p243 = por %p241, %p242
      %p245 = scmp.ne.s32.totalorder %s230, %s244
      %p246 = scmp.eq.s32.totalorder %s31, 0
      %p247 = por %p245, %p246
      %s249 = sadd.s32 %s248, 1
      %p252 = scmp.eq.s32.totalorder %s25, 2
      %p253 = scmp.ne.s32.totalorder %s248, %s250
      %p254 = scmp.eq.s32.totalorder %s25, 0
      %p255 = por %p253, %p254
      %p256 = scmp.ne.s32.totalorder %s248, %s250
      %p257 = scmp.eq.s32.totalorder %s30, 2
      %p258 = por %p256, %p257
      %p259 = scmp.ne.s32.totalorder %s250, %s251
      %p260 = scmp.eq.s32.totalorder %s30, 0
      %p261 = por %p259, %p260
      %p262 = scmp.ne.s32.totalorder %s250, %s251
      %p263 = scmp.eq.s32.totalorder %s31, 2
      %p264 = por %p262, %p263
      %p266 = scmp.ne.s32.totalorder %s251, %s265
      %p267 = scmp.eq.s32.totalorder %s31, 0
      %p268 = por %p266, %p267
      %s270 = sadd.s32 %s269, 1
      %p273 = scmp.eq.s32.totalorder %s25, 2
      %p274 = scmp.ne.s32.totalorder %s269, %s271
      %p275 = scmp.eq.s32.totalorder %s25, 0
      %p276 = por %p274, %p275
      %p277 = scmp.ne.s32.totalorder %s269, %s271
      %p278 = scmp.eq.s32.totalorder %s30, 2
      %p279 = por %p277, %p278
      %p280 = scmp.ne.s32.totalorder %s271, %s272
      %p281 = scmp.eq.s32.totalorder %s30, 0
      %p282 = por %p280, %p281
      %p283 = scmp.ne.s32.totalorder %s271, %s272
      %p284 = scmp.eq.s32.totalorder %s31, 2
      %p285 = por %p283, %p284
      %p287 = scmp.ne.s32.totalorder %s272, %s286
      %p288 = scmp.eq.s32.totalorder %s31, 0
      %p289 = por %p287, %p288
      %p290 = scmp.le.s32.totalorder 1, %s25
      %p291 = scmp.lt.s32.totalorder %s25, 4
      %p292 = pnand %p290, %p291
      %p293 = pneg %p292
      // Predicated region
      $region9: #{tpu_custom_call.1} parent=5 // pred_check
        _
      $region10: #{tpu_custom_call.1} parent=5 // pred_check_branch
        %295 = sbr.rel (%p292) target = $region12
      $region11: #{tpu_custom_call.1} parent=5 // pred_region
        %s296 = ssub.s32 %s25, 1
        // Predicated region
        $region13: #{tpu_custom_call.1} parent=11 // pred_check
          %p297 = pneg %p58
        $region14: #{tpu_custom_call.1} parent=11 // pred_check_branch
          %299 = sbr.rel (%p297) target = $region16
        $region15: #{tpu_custom_call.1} parent=11 // pred_region
          %s301 = ssub.s32 32, 32
          %302 = vsyncadd [#allocation5], %s301
          %s304 = sshll.u32 [#allocation4], 4
          %s305 = int_to_ptr.vmem [resolvable:$true] %s304
          %307 = dma.hbm_to_vmem [thread:$0]  %s0, 32, %s305, [#allocation5]
        $region16: #{tpu_custom_call.1} parent=11 // pred_fallthru
          _
        // Predicated region
        $region17: #{tpu_custom_call.1} parent=11 // pred_check
          %p308 = pneg %p79
        $region18: #{tpu_custom_call.1} parent=11 // pred_check_branch
          %310 = sbr.rel (%p308) target = $region20
        $region19: #{tpu_custom_call.1} parent=11 // pred_region
          %s312 = ssub.s32 64, 64
          %313 = vsyncadd [#allocation8], %s312
          %s315 = sshll.u32 [#allocation7], 4
          %s316 = int_to_ptr.vmem [resolvable:$true] %s315
          %318 = dma.hbm_to_vmem [thread:$0]  %s1, 64, %s316, [#allocation8]
        $region20: #{tpu_custom_call.1} parent=11 // pred_fallthru
          _
        // Predicated region
        $region21: #{tpu_custom_call.1} parent=11 // pred_check
          %p319 = pneg %p100
        $region22: #{tpu_custom_call.1} parent=11 // pred_check_branch
          %321 = sbr.rel (%p319) target = $region24
        $region23: #{tpu_custom_call.1} parent=11 // pred_region
          %s323 = ssub.s32 64, 64
          %324 = vsyncadd [#allocation8], %s323
          %s326 = sshll.u32 [#allocation9], 4
          %s327 = int_to_ptr.vmem [resolvable:$true] %s326
          %329 = dma.hbm_to_vmem [thread:$0]  %s2, 64, %s327, [#allocation8]
        $region24: #{tpu_custom_call.1} parent=11 // pred_fallthru
          _
        // Predicated region
        $region25: #{tpu_custom_call.1} parent=11 // pred_check
          %p330 = pneg %p121
        $region26: #{tpu_custom_call.1} parent=11 // pred_check_branch
          %332 = sbr.rel (%p330) target = $region28
        $region27: #{tpu_custom_call.1} parent=11 // pred_region
          _
        $region28: #{tpu_custom_call.1} parent=11 // pred_fallthru
          _
      $region12: #{tpu_custom_call.1} parent=5 // pred_fallthru
        _
      %p333 = scmp.lt.s32.totalorder %s25, 3
      // Predicated region
      $region29: #{tpu_custom_call.1} parent=5 // pred_check
        %p334 = pneg %p333
      $region30: #{tpu_custom_call.1} parent=5 // pred_check_branch
        %336 = sbr.rel (%p334) target = $region32
      $region31: #{tpu_custom_call.1} parent=5 // pred_region
        // Predicated region
        $region33: #{tpu_custom_call.1} parent=31 // pred_check
          %p337 = pneg %p143
        $region34: #{tpu_custom_call.1} parent=31 // pred_check_branch
          %339 = sbr.rel (%p337) target = $region36
        $region35: #{tpu_custom_call.1} parent=31 // pred_region
          %s340 = sand.u32 %s25, 1
          %s341 = scalar_lea.sflag [#allocation11], %s340
          %s342 = sand.u32 %s133, 1
          %s343 = smul.addr %s342, 4
          %s344 = scalar_lea.vmem [#allocation10], %s343
          %s345 = sadd.s32 %s32, %s33
          %s346 = smul.u32 2, %s345
          %s348 = ssub.s32 64, 64
          %349 = vsyncadd %s341, %s348
          %s350 = smul.addr %s346, 32
          %s351 = scalar_lea.hbm %s4, %s350
          %s353 = sshll.u32 %s344, 4
          %s354 = int_to_ptr.vmem [resolvable:$true] %s353
          %356 = dma.hbm_to_vmem [thread:$0]  %s351, 64, %s354, %s341
        $region36: #{tpu_custom_call.1} parent=31 // pred_fallthru
          _
        // Predicated region
        $region37: #{tpu_custom_call.1} parent=31 // pred_check
          %p357 = pneg %p171
        $region38: #{tpu_custom_call.1} parent=31 // pred_check_branch
          %359 = sbr.rel (%p357) target = $region40
        $region39: #{tpu_custom_call.1} parent=31 // pred_region
          %s360 = sand.u32 %s25, 1
          %s361 = scalar_lea.sflag [#allocation11], %s360
          %s362 = sand.u32 %s161, 1
          %s363 = smul.addr %s362, 256
          %s364 = scalar_lea.vmem [#allocation12], %s363
          %s365 = smul.u32 2, %s33
          %s367 = ssub.s32 4096, 4096
          %368 = vsyncadd %s361, %s367
          %s369 = smul.addr %s32, 64
          %s370 = sadd.s32 %s365, %s369
          %s371 = smul.addr %s370, 64
          %s372 = scalar_lea.hbm %s5, %s371
          %s373 = sshll.u32 %s364, 4
          %s374 = int_to_ptr.vmem [resolvable:$true] %s373
          %379 = dma.hbm_to_vmem [thread:$0]  %s372, 4096, %s374, %s361, 128, 128, 8
        $region40: #{tpu_custom_call.1} parent=31 // pred_fallthru
          _
      $region32: #{tpu_custom_call.1} parent=5 // pred_fallthru
        _
      %p380 = scmp.le.s32.totalorder 1, %s25
      %p381 = scmp.lt.s32.totalorder %s25, 4
      %p382 = pnand %p380, %p381
      %p383 = pneg %p382
      // Predicated region
      $region41: #{tpu_custom_call.1} parent=5 // pred_check
        _
      $region42: #{tpu_custom_call.1} parent=5 // pred_check_branch
        %385 = sbr.rel (%p382) target = $region44
      $region43: #{tpu_custom_call.1} parent=5 // pred_region
        %s386 = ssub.s32 %s25, 1
        // Predicated region
        $region45: #{tpu_custom_call.1} parent=43 // pred_check
          %p387 = pneg %p58
        $region46: #{tpu_custom_call.1} parent=43 // pred_check_branch
          %389 = sbr.rel (%p387) target = $region48
        $region47: #{tpu_custom_call.1} parent=43 // pred_region
          %390 = dma.done [#allocation5], 32
        $region48: #{tpu_custom_call.1} parent=43 // pred_fallthru
          _
        // Predicated region
        $region49: #{tpu_custom_call.1} parent=43 // pred_check
          %p391 = pneg %p79
        $region50: #{tpu_custom_call.1} parent=43 // pred_check_branch
          %393 = sbr.rel (%p391) target = $region52
        $region51: #{tpu_custom_call.1} parent=43 // pred_region
          %394 = dma.done [#allocation8], 64
        $region52: #{tpu_custom_call.1} parent=43 // pred_fallthru
          _
        // Predicated region
        $region53: #{tpu_custom_call.1} parent=43 // pred_check
          %p395 = pneg %p100
        $region54: #{tpu_custom_call.1} parent=43 // pred_check_branch
          %397 = sbr.rel (%p395) target = $region56
        $region55: #{tpu_custom_call.1} parent=43 // pred_region
          %398 = dma.done [#allocation8], 64
        $region56: #{tpu_custom_call.1} parent=43 // pred_fallthru
          _
        %s399 = sand.u32 %s30, 1
        %s400 = scalar_lea.sflag [#allocation11], %s399
        %s401 = sand.u32 %s136, 1
        %s402 = smul.addr %s401, 4
        %s403 = scalar_lea.vmem [#allocation10], %s402
        // Predicated region
        $region57: #{tpu_custom_call.1} parent=43 // pred_check
          %p404 = pneg %p149
        $region58: #{tpu_custom_call.1} parent=43 // pred_check_branch
          %406 = sbr.rel (%p404) target = $region60
        $region59: #{tpu_custom_call.1} parent=43 // pred_region
          %407 = dma.done %s400, 64
        $region60: #{tpu_custom_call.1} parent=43 // pred_fallthru
          _
        %s408 = sand.u32 %s30, 1
        %s409 = scalar_lea.sflag [#allocation11], %s408
        %s410 = sand.u32 %s164, 1
        %s411 = smul.addr %s410, 256
        %s412 = scalar_lea.vmem [#allocation12], %s411
        // Predicated region
        $region61: #{tpu_custom_call.1} parent=43 // pred_check
          %p413 = pneg %p177
        $region62: #{tpu_custom_call.1} parent=43 // pred_check_branch
          %415 = sbr.rel (%p413) target = $region64
        $region63: #{tpu_custom_call.1} parent=43 // pred_region
          %416 = dma.done %s409, 4096
        $region64: #{tpu_custom_call.1} parent=43 // pred_fallthru
          _
        %p417 = pneg %p58
        %p418 = pneg %p55
        %p419 = pneg %p79
        %p420 = pneg %p76
        %p421 = pneg %p100
        %p422 = pneg %p97
        %p423 = pneg %p121
        %p424 = pneg %p118
        %s425 = sand.u32 %s30, 1
        %s426 = scalar_lea.sflag [#allocation11], %s425
        %s427 = sand.u32 %s136, 1
        %s428 = smul.addr %s427, 4
        %s429 = scalar_lea.vmem [#allocation10], %s428
        %p430 = pneg %p149
        %p431 = pneg %p146
        %s432 = sand.u32 %s30, 1
        %s433 = scalar_lea.sflag [#allocation11], %s432
        %s434 = sand.u32 %s164, 1
        %s435 = smul.addr %s434, 256
        %s436 = scalar_lea.vmem [#allocation12], %s435
        %p437 = pneg %p177
        %p438 = pneg %p174
        %p439 = pneg %p198
        %p440 = pneg %p195
        %p441 = pneg %p219
        %p442 = pneg %p216
        %p443 = pneg %p240
        %p444 = pneg %p237
        %p445 = pneg %p261
        %p446 = pneg %p258
        %p447 = pneg %p282
        %p448 = pneg %p279
        %s449 = sadd.s32 %s34, %s35
        %s450 = smul.u32 2, %s449
        %s451 = smul.u32 2, %s35
        %v452 = vld [vmem:[#allocation9] sm:$0xf]
        %p453 = scmp.eq.s32.totalorder %s34, 0
        %p454 = scmp.eq.s32.totalorder %s35, 0
        %p455 = pnand %p453, %p454
        %p456 = pneg %p455
        // Predicated region
        $region65: #{tpu_custom_call.1} parent=43 // pred_check
          _
        $region66: #{tpu_custom_call.1} parent=43 // pred_check_branch
          %458 = sbr.rel (%p455) target = $region68
        $region67: #{tpu_custom_call.1} parent=43 // pred_region
          %vm459 = vcmask 1024
          %460 = vst.msk [vmem:[#allocation3] sm:$0x3] %vm459, 0.0
          %v461 = vld [vmem:[#allocation7] sm:$0xf]
          %v462 = vadd.f32 %v461, %v452
          %463 = vst [vmem:[#allocation19] sm:$0xf] %v462
        $region68: #{tpu_custom_call.1} parent=43 // pred_fallthru
          _
        // Predicated region
        $region69: #{tpu_custom_call.1} parent=43 // pred_check
          %p464 = pneg %p454
        $region70: #{tpu_custom_call.1} parent=43 // pred_check_branch
          %466 = sbr.rel (%p464) target = $region72
        $region71: #{tpu_custom_call.1} parent=43 // pred_region
          %vm467 = vcmask 1024
          %468 = vst.msk [vmem:[#allocation2] sm:$0x3] %vm467, 0.0
        $region72: #{tpu_custom_call.1} parent=43 // pred_fallthru
          _
        %v469 = vld [vmem:[%s412] sm:$0xff]
        %v470 = vld [vmem:[%s412 + $0x8] sm:$0xff]
        %v471 = vld [vmem:[%s412 + $0x10] sm:$0xff]
        %v472 = vld [vmem:[%s412 + $0x18] sm:$0xff]
        %v473 = vld [vmem:[%s412 + $0x20] sm:$0xff]
        %v474 = vld [vmem:[%s412 + $0x28] sm:$0xff]
        %v475 = vld [vmem:[%s412 + $0x30] sm:$0xff]
        %v476 = vld [vmem:[%s412 + $0x38] sm:$0xff]
        %v477 = vld [vmem:[%s412 + $0x40] sm:$0xff]
        %v478 = vld [vmem:[%s412 + $0x48] sm:$0xff]
        %v479 = vld [vmem:[%s412 + $0x50] sm:$0xff]
        %v480 = vld [vmem:[%s412 + $0x58] sm:$0xff]
        %v481 = vld [vmem:[%s412 + $0x60] sm:$0xff]
        %v482 = vld [vmem:[%s412 + $0x68] sm:$0xff]
        %v483 = vld [vmem:[%s412 + $0x70] sm:$0xff]
        %v484 = vld [vmem:[%s412 + $0x78] sm:$0xff]
        %v485 = vld [vmem:[%s412 + $0x80] sm:$0xff]
        %v486 = vld [vmem:[%s412 + $0x88] sm:$0xff]
        %v487 = vld [vmem:[%s412 + $0x90] sm:$0xff]
        %v488 = vld [vmem:[%s412 + $0x98] sm:$0xff]
        %v489 = vld [vmem:[%s412 + $0xa0] sm:$0xff]
        %v490 = vld [vmem:[%s412 + $0xa8] sm:$0xff]
        %v491 = vld [vmem:[%s412 + $0xb0] sm:$0xff]
        %v492 = vld [vmem:[%s412 + $0xb8] sm:$0xff]
        %v493 = vld [vmem:[%s412 + $0xc0] sm:$0xff]
        %v494 = vld [vmem:[%s412 + $0xc8] sm:$0xff]
        %v495 = vld [vmem:[%s412 + $0xd0] sm:$0xff]
        %v496 = vld [vmem:[%s412 + $0xd8] sm:$0xff]
        %v497 = vld [vmem:[%s412 + $0xe0] sm:$0xff]
        %v498 = vld [vmem:[%s412 + $0xe8] sm:$0xff]
        %v499 = vld [vmem:[%s412 + $0xf0] sm:$0xff]
        %v500 = vld [vmem:[%s412 + $0xf8] sm:$0xff]
        %v503 = vunpack.c.l.s4 1983009808
        %v504 = vunpack.c.0.s8 %v503
        %v505 = vlaneseq
        %v506 = vshrl.u32 %v505, 7
        %v507 = vsub.s32 %v504, %v506
        %v508 = vrot.slane %v452, %v507
        %v509 = vcombine.high %v508, %v508
        %v544 = vunpack.c.l.b16 %v469
        %v545 = vunpack.c.h.b16 %v469
        %v546 = vunpack.c.l.b16 %v470
        %v547 = vunpack.c.h.b16 %v470
        %v548 = vunpack.c.l.b16 %v471
        %v549 = vunpack.c.h.b16 %v471
        %v550 = vunpack.c.l.b16 %v472
        %v551 = vunpack.c.h.b16 %v472
        %v552 = vunpack.c.l.b16 %v473
        %v553 = vunpack.c.h.b16 %v473
        %v554 = vunpack.c.l.b16 %v474
        %v555 = vunpack.c.h.b16 %v474
        %v556 = vunpack.c.l.b16 %v475
        %v557 = vunpack.c.h.b16 %v475
        %v558 = vunpack.c.l.b16 %v476
        %v559 = vunpack.c.h.b16 %v476
        %v560 = vunpack.c.l.b16 %v477
        %v561 = vunpack.c.h.b16 %v477
        %v562 = vunpack.c.l.b16 %v478
        %v563 = vunpack.c.h.b16 %v478
        %v564 = vunpack.c.l.b16 %v479
        %v565 = vunpack.c.h.b16 %v479
        %v566 = vunpack.c.l.b16 %v480
        %v567 = vunpack.c.h.b16 %v480
        %v568 = vunpack.c.l.b16 %v481
        %v569 = vunpack.c.h.b16 %v481
        %v570 = vunpack.c.l.b16 %v482
        %v571 = vunpack.c.h.b16 %v482
        %v572 = vunpack.c.l.b16 %v483
        %v573 = vunpack.c.h.b16 %v483
        %v574 = vunpack.c.l.b16 %v484
        %v575 = vunpack.c.h.b16 %v484
        %v576 = vunpack.c.l.b16 %v485
        %v577 = vunpack.c.h.b16 %v485
        %v578 = vunpack.c.l.b16 %v486
        %v579 = vunpack.c.h.b16 %v486
        %v580 = vunpack.c.l.b16 %v487
        %v581 = vunpack.c.h.b16 %v487
        %v582 = vunpack.c.l.b16 %v488
        %v583 = vunpack.c.h.b16 %v488
        %v584 = vunpack.c.l.b16 %v489
        %v585 = vunpack.c.h.b16 %v489
        %v586 = vunpack.c.l.b16 %v490
        %v587 = vunpack.c.h.b16 %v490
        %v588 = vunpack.c.l.b16 %v491
        %v589 = vunpack.c.h.b16 %v491
        %v590 = vunpack.c.l.b16 %v492
        %v591 = vunpack.c.h.b16 %v492
        %v592 = vunpack.c.l.b16 %v493
        %v593 = vunpack.c.h.b16 %v493
        %v594 = vunpack.c.l.b16 %v494
        %v595 = vunpack.c.h.b16 %v494
        %v596 = vunpack.c.l.b16 %v495
        %v597 = vunpack.c.h.b16 %v495
        %v598 = vunpack.c.l.b16 %v496
        %v599 = vunpack.c.h.b16 %v496
        %v600 = vunpack.c.l.b16 %v497
        %v601 = vunpack.c.h.b16 %v497
        %v602 = vunpack.c.l.b16 %v498
        %v603 = vunpack.c.h.b16 %v498
        %v604 = vunpack.c.l.b16 %v499
        %v605 = vunpack.c.h.b16 %v499
        %v606 = vunpack.c.l.b16 %v500
        %v607 = vunpack.c.h.b16 %v500
        %v608 = vpack.c.b16 %v546, %v544
        %v609 = vpack.c.b16 %v547, %v545
        %v610 = vpack.c.b16 %v550, %v548
        %v611 = vpack.c.b16 %v551, %v549
        %v612 = vpack.c.b16 %v554, %v552
        %v613 = vpack.c.b16 %v555, %v553
        %v614 = vpack.c.b16 %v558, %v556
        %v615 = vpack.c.b16 %v559, %v557
        %v616 = vpack.c.b16 %v562, %v560
        %v617 = vpack.c.b16 %v563, %v561
        %v618 = vpack.c.b16 %v566, %v564
        %v619 = vpack.c.b16 %v567, %v565
        %v620 = vpack.c.b16 %v570, %v568
        %v621 = vpack.c.b16 %v571, %v569
        %v622 = vpack.c.b16 %v574, %v572
        %v623 = vpack.c.b16 %v575, %v573
        %v624 = vpack.c.b16 %v578, %v576
        %v625 = vpack.c.b16 %v579, %v577
        %v626 = vpack.c.b16 %v582, %v580
        %v627 = vpack.c.b16 %v583, %v581
        %v628 = vpack.c.b16 %v586, %v584
        %v629 = vpack.c.b16 %v587, %v585
        %v630 = vpack.c.b16 %v590, %v588
        %v631 = vpack.c.b16 %v591, %v589
        %v632 = vpack.c.b16 %v594, %v592
        %v633 = vpack.c.b16 %v595, %v593
        %v634 = vpack.c.b16 %v598, %v596
        %v635 = vpack.c.b16 %v599, %v597
        %v636 = vpack.c.b16 %v602, %v600
        %v637 = vpack.c.b16 %v603, %v601
        %v638 = vpack.c.b16 %v606, %v604
        %v639 = vpack.c.b16 %v607, %v605
        %672 = vmatprep.subr.bf16.mxu0 %v623
        %673 = vmatpush1.bf16.msra.mxu0 %v622
        %674 = vmatprep.subr.bf16.mxu0 %v621
        %675 = vmatpush1.bf16.msra.mxu0 %v620
        %676 = vmatprep.subr.bf16.mxu0 %v619
        %677 = vmatpush1.bf16.msra.mxu0 %v618
        %678 = vmatprep.subr.bf16.mxu0 %v617
        %679 = vmatpush1.bf16.msra.mxu0 %v616
        %680 = vmatprep.subr.bf16.mxu0 %v615
        %681 = vmatpush1.bf16.msra.mxu0 %v614
        %682 = vmatprep.subr.bf16.mxu0 %v613
        %683 = vmatpush1.bf16.msra.mxu0 %v612
        %684 = vmatprep.subr.bf16.mxu0 %v611
        %685 = vmatpush1.bf16.msra.mxu0 %v610
        %686 = vmatprep.subr.bf16.mxu0 %v609
        %687 = vmatpush1.bf16.msra.mxu0 %v608
        %688 = vmatprep.subr.bf16.mxu0 %v639
        %689 = vmatpush2.bf16.msra.mxu0 %v638
        %690 = vmatprep.subr.bf16.mxu0 %v637
        %691 = vmatpush2.bf16.msra.mxu0 %v636
        %692 = vmatprep.subr.bf16.mxu0 %v635
        %693 = vmatpush2.bf16.msra.mxu0 %v634
        %694 = vmatprep.subr.bf16.mxu0 %v633
        %695 = vmatpush2.bf16.msra.mxu0 %v632
        %696 = vmatprep.subr.bf16.mxu0 %v631
        %697 = vmatpush2.bf16.msra.mxu0 %v630
        %698 = vmatprep.subr.bf16.mxu0 %v629
        %699 = vmatpush2.bf16.msra.mxu0 %v628
        %700 = vmatprep.subr.bf16.mxu0 %v627
        %701 = vmatpush2.bf16.msra.mxu0 %v626
        %702 = vmatprep.subr.bf16.mxu0 %v625
        %703 = vmatpush2.bf16.msra.mxu0 %v624
        %704 = vmatprep.mubr.f32.mxu0 %v509
        %705 = vmatmul.mubr.f32.gmra.mxu0 %v508
        %v706 = vpop.f32.mrf.mxu0
        %v707 = vadd.f32 0.0, %v706
        %v708 = vpop.f32.mrf.mxu0
        %v709 = vadd.f32 0.0, %v708
        %710 = vdwg.mxu0
        %v711 = vld [vmem:[%s403] sm:$0xf]
        %v712 = vsub.f32 1.0, %v711
        %v715 = vcombine.low %v707, %v709
        %v717 = vunpack.c.l.s4 1983009808
        %v718 = vunpack.c.0.s8 %v717
        %v719 = vlaneseq
        %v720 = vshrl.u32 %v719, 7
        %v721 = vsub.s32 %v718, %v720
        %v722 = vrot.slane %v715, %v721
        %v724 = vmul.f32 %v712, %v722
        %v725 = vld [vmem:[#allocation2] sm:$0x3]
        %v726 = vmul.f32 %v724, %v724
        %v729 = vunpack.c.l.s4 1983009808
        %v730 = vunpack.c.0.s8 %v729
        %v731 = vlaneseq
        %v732 = vshrl.u32 %v731, 7
        %v733 = vsub.s32 %v730, %v732
        %v734 = vrot.slane %v726, %v733
        %v735 = vcombine.high %v734, %v734
        %vm738 = vcmask 1041408
        %v739 = vsel %vm738, %v734, 0.0
        %v740 = vsel %vm738, %v735, 0.0
        %v741 = vadd.f32 %v739, %v740
        %742 = vadd.xlane.f32.xlu0 %v741
        %v743 = vpop.xlane.xlu0 %742
        %v744 = vadd.f32 %v725, %v743
        %vm745 = vcmask 1024
        %746 = vst.msk [vmem:[#allocation2] sm:$0x3] %vm745, %v744
        // Predicated region
        $region73: #{tpu_custom_call.1} parent=43 // pred_check
          %p747 = pneg %p454
        $region74: #{tpu_custom_call.1} parent=43 // pred_check_branch
          %749 = sbr.rel (%p747) target = $region76
        $region75: #{tpu_custom_call.1} parent=43 // pred_region
          %v750 = vld [vmem:[#allocation3] sm:$0x3]
          %v751 = vld [vmem:[#allocation2] sm:$0x3]
          %v752 = vrsqrt.pop %v751
          %v753 = vmul.f32 %v751, %v752
          %vm754 = vcmp.eq.f32.partialorder %v751, inf
          %v755 = vsel %vm754, %v751, %v753
          %vm756 = vcmp.eq.f32.partialorder %v751, 0.0
          %v757 = vand.u32 %v751, 2147483648
          %v758 = vsel %vm756, %v757, %v755
          %v759 = vadd.f32 %v750, %v758
          %760 = vst.msk [vmem:[#allocation3] sm:$0x3] %vm745, %v759
        $region76: #{tpu_custom_call.1} parent=43 // pred_fallthru
          _
        %p761 = scmp.eq.s32.totalorder %s34, 2
        %p762 = pnand %p761, %p454
        %p763 = pneg %p762
        // Predicated region
        $region77: #{tpu_custom_call.1} parent=43 // pred_check
          _
        $region78: #{tpu_custom_call.1} parent=43 // pred_check_branch
          %765 = sbr.rel (%p762) target = $region80
        $region79: #{tpu_custom_call.1} parent=43 // pred_region
          %v766 = vld [vmem:[#allocation3] sm:$0x3]
          %v767 = vsel %vm745, %v766, 0.0
          %v768 = vrot.slane %v767, 4
          %v769 = vadd.f32 %v767, %v768
          %v770 = vrot.slane %v769, 2
          %v771 = vadd.f32 %v769, %v770
          %v772 = vrot.slane %v771, 1
          %v773 = vadd.f32 %v771, %v772
          %v774 = vrcp.pop 2.0
          %v775 = vmul.f32 %v773, %v774
          %v776 = vld [vmem:[%s3] sm:$0xf]
          %v777 = vmul.f32 %v776, %v452
          %v780 = vunpack.c.l.s4 1983009808
          %v781 = vunpack.c.0.s8 %v780
          %v782 = vlaneseq
          %v783 = vshrl.u32 %v782, 7
          %v784 = vsub.s32 %v781, %v783
          %v785 = vrot.slane %v777, %v784
          %v786 = vcombine.high %v785, %v785
          %v789 = vsel %vm738, %v785, 0.0
          %v790 = vsel %vm738, %v786, 0.0
          %v791 = vadd.f32 %v789, %v790
          %792 = vadd.xlane.f32.xlu0 %v791
          %v793 = vpop.xlane.xlu0 %792
          %v794 = vmul.f32 %v776, %v776
          %v797 = vunpack.c.l.s4 1983009808
          %v798 = vunpack.c.0.s8 %v797
          %v799 = vlaneseq
          %v800 = vshrl.u32 %v799, 7
          %v801 = vsub.s32 %v798, %v800
          %v802 = vrot.slane %v794, %v801
          %v803 = vcombine.high %v802, %v802
          %v806 = vsel %vm738, %v802, 0.0
          %v807 = vsel %vm738, %v803, 0.0
          %v808 = vadd.f32 %v806, %v807
          %809 = vadd.xlane.f32.xlu0 %v808
          %v810 = vpop.xlane.xlu0 %809
          %v811 = vrot.slane %v810, 4
          %v812 = vadd.f32 %v810, %v811
          %v813 = vrot.slane %v812, 2
          %v814 = vadd.f32 %v812, %v813
          %v815 = vrot.slane %v814, 1
          %v816 = vadd.f32 %v814, %v815
          %s817 = vtos %v816
          %v818 = vstv %s817
          %v819 = vrsqrt.pop %v818
          %v820 = vmul.f32 %v818, %v819
          %vm821 = vcmp.eq.f32.partialorder %v818, inf
          %v822 = vsel %vm821, %v818, %v820
          %vm823 = vcmp.eq.f32.partialorder %v818, 0.0
          %v824 = vand.u32 %v818, 2147483648
          %v825 = vsel %vm823, %v824, %v822
          %v826 = vmul.f32 %v452, %v452
          %v829 = vunpack.c.l.s4 1983009808
          %v830 = vunpack.c.0.s8 %v829
          %v831 = vlaneseq
          %v832 = vshrl.u32 %v831, 7
          %v833 = vsub.s32 %v830, %v832
          %v834 = vrot.slane %v826, %v833
          %v835 = vcombine.high %v834, %v834
          %v838 = vsel %vm738, %v834, 0.0
          %v839 = vsel %vm738, %v835, 0.0
          %v840 = vadd.f32 %v838, %v839
          %841 = vadd.xlane.f32.xlu0 %v840
          %v842 = vpop.xlane.xlu0 %841
          %v843 = vrsqrt.pop %v842
          %v844 = vmul.f32 %v842, %v843
          %vm845 = vcmp.eq.f32.partialorder %v842, inf
          %v846 = vsel %vm845, %v842, %v844
          %vm847 = vcmp.eq.f32.partialorder %v842, 0.0
          %v848 = vand.u32 %v842, 2147483648
          %v849 = vsel %vm847, %v848, %v846
          %v850 = vmul.f32 %v849, %v825
          %v851 = vrcp.pop %v850
          %v852 = vmul.f32 %v793, %v851
          %v853 = vsel %vm738, %v852, 0.0
          %v854 = vrot.slane %v853, 4
          %v855 = vadd.f32 %v853, %v854
          %v856 = vrot.slane %v855, 2
          %v857 = vadd.f32 %v855, %v856
          %v858 = vrot.slane %v857, 1
          %v859 = vadd.f32 %v857, %v858
          %v860 = vmul.f32 %v859, %v774
          %v861 = vmul.f32 %v860, -0.01
          %v862 = vld [vmem:[#allocation4] sm:$0x3]
          %v863 = vmul.f32 %v862, %v862
          %v865 = vlaneseq
          %v866 = vshrl.u32 %v865, 7
          %v867 = vsub.s32 0, %v866
          %v868 = vrot.slane %v863, %v867
          %v869 = vlaneseq
          %v870 = vshrl.u32 %v869, 7
          %v871 = vsub.s32 1, %v870
          %v872 = vrot.slane %v863, %v871
          %vm875 = vcmask 1040384
          %v876 = vsel %vm875, %v868, 0.0
          %v877 = vsel %vm875, %v872, 0.0
          %v878 = vadd.f32 %v876, %v877
          %879 = vadd.xlane.f32.xlu0 %v878
          %v880 = vpop.xlane.xlu0 %879
          %v881 = vrot.slane %v880, 4
          %v882 = vadd.f32 %v880, %v881
          %v883 = vrot.slane %v882, 2
          %v884 = vadd.f32 %v882, %v883
          %v885 = vrot.slane %v884, 1
          %v886 = vadd.f32 %v884, %v885
          %s887 = vtos %v886
          %v888 = vstv %s887
          %v889 = vadd.f32 %v888, 1e-08
          %v890 = vrsqrt.pop %v889
          %v891 = vmul.f32 %v889, %v890
          %vm892 = vcmp.eq.f32.partialorder %v889, inf
          %v893 = vsel %vm892, %v889, %v891
          %vm894 = vcmp.eq.f32.partialorder %v889, 0.0
          %v895 = vand.u32 %v889, 2147483648
          %v896 = vsel %vm894, %v895, %v893
          %v897 = vmul.f32 %v896, 1e-06
          %vm898 = vcmask 0
          %899 = vst.msk [vmem:[#allocation14] sm:$0x1] %vm898, %v775
          %900 = vst.msk [vmem:[#allocation16] sm:$0x1] %vm898, %v861
          %901 = vst.msk [vmem:[#allocation17] sm:$0x1] %vm898, %v897
          %v902 = vadd.f32 %v775, %v861
          %v903 = vadd.f32 %v902, %v897
          %904 = vst.msk [vmem:[#allocation13] sm:$0x1] %vm898, %v903
        $region80: #{tpu_custom_call.1} parent=43 // pred_fallthru
          _
        // Predicated region
        $region81: #{tpu_custom_call.1} parent=43 // pred_check
          %p905 = pneg %p195
        $region82: #{tpu_custom_call.1} parent=43 // pred_check_branch
          %907 = sbr.rel (%p905) target = $region84
        $region83: #{tpu_custom_call.1} parent=43 // pred_region
          %s909 = ssub.s32 16, 16
          %910 = vsyncadd [#allocation6], %s909
          %s912 = sshll.u32 [#allocation13], 4
          %s913 = int_to_ptr.vmem [resolvable:$true] %s912
          %915 = dma.vmem_to_hbm [thread:$0]  %s913, 16, %s6, [#allocation6]
        $region84: #{tpu_custom_call.1} parent=43 // pred_fallthru
          _
        // Predicated region
        $region85: #{tpu_custom_call.1} parent=43 // pred_check
          %p916 = pneg %p216
        $region86: #{tpu_custom_call.1} parent=43 // pred_check_branch
          %918 = sbr.rel (%p916) target = $region88
        $region87: #{tpu_custom_call.1} parent=43 // pred_region
          %s920 = ssub.s32 16, 16
          %921 = vsyncadd [#allocation15], %s920
          %s923 = sshll.u32 [#allocation14], 4
          %s924 = int_to_ptr.vmem [resolvable:$true] %s923
          %926 = dma.vmem_to_hbm [thread:$0]  %s924, 16, %s7, [#allocation15]
        $region88: #{tpu_custom_call.1} parent=43 // pred_fallthru
          _
        // Predicated region
        $region89: #{tpu_custom_call.1} parent=43 // pred_check
          %p927 = pneg %p237
        $region90: #{tpu_custom_call.1} parent=43 // pred_check_branch
          %929 = sbr.rel (%p927) target = $region92
        $region91: #{tpu_custom_call.1} parent=43 // pred_region
          %s931 = ssub.s32 16, 16
          %932 = vsyncadd [#allocation15], %s931
          %s934 = sshll.u32 [#allocation16], 4
          %s935 = int_to_ptr.vmem [resolvable:$true] %s934
          %937 = dma.vmem_to_hbm [thread:$0]  %s935, 16, %s8, [#allocation15]
        $region92: #{tpu_custom_call.1} parent=43 // pred_fallthru
          _
        // Predicated region
        $region93: #{tpu_custom_call.1} parent=43 // pred_check
          %p938 = pneg %p258
        $region94: #{tpu_custom_call.1} parent=43 // pred_check_branch
          %940 = sbr.rel (%p938) target = $region96
        $region95: #{tpu_custom_call.1} parent=43 // pred_region
          %s942 = ssub.s32 16, 16
          %943 = vsyncadd [#allocation18], %s942
          %s945 = sshll.u32 [#allocation17], 4
          %s946 = int_to_ptr.vmem [resolvable:$true] %s945
          %948 = dma.vmem_to_hbm [thread:$0]  %s946, 16, %s9, [#allocation18]
        $region96: #{tpu_custom_call.1} parent=43 // pred_fallthru
          _
        // Predicated region
        $region97: #{tpu_custom_call.1} parent=43 // pred_check
          %p949 = pneg %p279
        $region98: #{tpu_custom_call.1} parent=43 // pred_check_branch
          %951 = sbr.rel (%p949) target = $region100
        $region99: #{tpu_custom_call.1} parent=43 // pred_region
          %s953 = ssub.s32 64, 64
          %954 = vsyncadd [#allocation18], %s953
          %s956 = sshll.u32 [#allocation19], 4
          %s957 = int_to_ptr.vmem [resolvable:$true] %s956
          %959 = dma.vmem_to_hbm [thread:$0]  %s957, 64, %s10, [#allocation18]
        $region100: #{tpu_custom_call.1} parent=43 // pred_fallthru
          _
        // Predicated region
        $region101: #{tpu_custom_call.1} parent=43 // pred_check
          %p960 = pneg %p195
        $region102: #{tpu_custom_call.1} parent=43 // pred_check_branch
          %962 = sbr.rel (%p960) target = $region104
        $region103: #{tpu_custom_call.1} parent=43 // pred_region
          %963 = dma.done [#allocation6], 16
        $region104: #{tpu_custom_call.1} parent=43 // pred_fallthru
          _
        // Predicated region
        $region105: #{tpu_custom_call.1} parent=43 // pred_check
          %p964 = pneg %p216
        $region106: #{tpu_custom_call.1} parent=43 // pred_check_branch
          %966 = sbr.rel (%p964) target = $region108
        $region107: #{tpu_custom_call.1} parent=43 // pred_region
          %967 = dma.done [#allocation15], 16
        $region108: #{tpu_custom_call.1} parent=43 // pred_fallthru
          _
        // Predicated region
        $region109: #{tpu_custom_call.1} parent=43 // pred_check
          %p968 = pneg %p237
        $region110: #{tpu_custom_call.1} parent=43 // pred_check_branch
          %970 = sbr.rel (%p968) target = $region112
        $region111: #{tpu_custom_call.1} parent=43 // pred_region
          %971 = dma.done [#allocation15], 16
        $region112: #{tpu_custom_call.1} parent=43 // pred_fallthru
          _
        // Predicated region
        $region113: #{tpu_custom_call.1} parent=43 // pred_check
          %p972 = pneg %p258
        $region114: #{tpu_custom_call.1} parent=43 // pred_check_branch
          %974 = sbr.rel (%p972) target = $region116
        $region115: #{tpu_custom_call.1} parent=43 // pred_region
          %975 = dma.done [#allocation18], 16
        $region116: #{tpu_custom_call.1} parent=43 // pred_fallthru
          _
        // Predicated region
        $region117: #{tpu_custom_call.1} parent=43 // pred_check
          %p976 = pneg %p279
        $region118: #{tpu_custom_call.1} parent=43 // pred_check_branch
          %978 = sbr.rel (%p976) target = $region120
        $region119: #{tpu_custom_call.1} parent=43 // pred_region
          %979 = dma.done [#allocation18], 64
        $region120: #{tpu_custom_call.1} parent=43 // pred_fallthru
          _
      $region44: #{tpu_custom_call.1} parent=5 // pred_fallthru
        _
      %p980 = scmp.le.s32.totalorder 2, %s25
      // Predicated region
      $region121: #{tpu_custom_call.1} parent=5 // pred_check
        %p981 = pneg %p980
      $region122: #{tpu_custom_call.1} parent=5 // pred_check_branch
        %983 = sbr.rel (%p981) target = $region124
      $region123: #{tpu_custom_call.1} parent=5 // pred_region
        %s984 = ssub.s32 %s25, 2
      $region124: #{tpu_custom_call.1} parent=5 // pred_fallthru
        _
    $region6: #{tpu_custom_call.1} parent=1 // loop_footer
      %s29 = sadd.s32 1, %s25
    $region7: #{tpu_custom_call.1} parent=1 // loop_footer_branch
      %24 = sbr.rel target = $region3
    $region8: #{tpu_custom_call.1} parent=1 // loop_exit
      _
    %985 = vsyncpa [#allocation5], 1
    %s986 = scalar_lea.sflag [#allocation5], 1
    %987 = vsyncpa %s986, 1
    %988 = vsyncpa [#allocation8], 1
    %989 = vsyncpa [#allocation11], 1
    %s990 = scalar_lea.sflag [#allocation11], 1
    %991 = vsyncpa %s990, 1
    %992 = vsyncpa [#allocation6], 1
    %s993 = scalar_lea.sflag [#allocation6], 1
    %994 = vsyncpa %s993, 1
    %995 = vsyncpa [#allocation15], 1
    %996 = vsyncpa [#allocation18], 1

</llo_original>
